<compile_context>
chip_gen: v5e
topology: v5e:2x2
jax: 0.10.0
libtpu: 0.0.40
codegen_flags: <defaults>
</compile_context>

<pallas_src>
import functools

import jax
import jax.numpy as jnp
from jax.experimental import pallas as pl
from jax.experimental.pallas import tpu as pltpu


def _cdiv(a, b):
    return -(-a // b)


def _round_up(x, m):
    return (x + m - 1) // m * m


def _gelu_f32(h, approx):
    if approx:
        # tanh-approximate GELU: tanh goes to the EUP slot (co-issues with MXU/VPU work).
        c = jnp.float32(0.7978845608028654)  # sqrt(2/pi)
        return 0.5 * h * (1.0 + jnp.tanh(c * (h + jnp.float32(0.044715) * h * h * h)))
    # exact erf GELU (matches torch nn.GELU() default)
    return 0.5 * h * (1.0 + jax.lax.erf(h * jnp.float32(0.7071067811865476)))


def _mlp_resident_kernel(x_ref, w1_ref, b1_ref, w2_ref, b2_ref, o_ref, *, approx_gelu):
    # fc1 (MXU, f32 accumulation regardless of operand dtype)
    h = jnp.dot(x_ref[...], w1_ref[...], preferred_element_type=jnp.float32)
    h = h + b1_ref[...]               # (1, HID_p) broadcasts over batch tile
    h = _gelu_f32(h, approx_gelu)
    # dropout with p=0.0 is identity.
    # TODO(synk): dropout mask for p>0 not implemented (module default is p=0.0).
    o = jnp.dot(h.astype(w2_ref.dtype), w2_ref[...], preferred_element_type=jnp.float32)
    o_ref[...] = (o + b2_ref[...]).astype(o_ref.dtype)


def _mlp_hid_tiled_kernel(x_ref, w1_ref, b1_ref, w2_ref, b2_ref, o_ref, acc_ref,
                          *, approx_gelu):
    j = pl.program_id(1)

    @pl.when(j == 0)
    def _init():
        acc_ref[...] = jnp.zeros_like(acc_ref)

    # fc1 column tile + GELU for this hidden slice
    h = jnp.dot(x_ref[...], w1_ref[...], preferred_element_type=jnp.float32)
    h = h + b1_ref[...]               # (1, tk)
    h = _gelu_f32(h, approx_gelu)
    # fc2 partial product over this hidden slice, accumulated in f32 scratch
    acc_ref[...] += jnp.dot(h.astype(w2_ref.dtype), w2_ref[...],
                            preferred_element_type=jnp.float32)

    @pl.when(j == pl.num_programs(1) - 1)
    def _finalize():
        o_ref[...] = (acc_ref[...] + b2_ref[...]).astype(o_ref.dtype)


def prepare_mlp_params(w1, b1, w2, b2, *, compute_dtype=jnp.bfloat16, feature_align=128):
    """Pad/cast the parameters ONCE (call at setup time, not per forward call).

    w1: (in, hid), b1: (hid,), w2: (hid, out), b2: (out,)  -- i.e. torch weight.T layout.
    feature_align: lane-dense padding granularity (128; use 256 on v6e/v7x if desired).
    """
    IN, HID = w1.shape
    OUT = w2.shape[1]
    IN_p = _round_up(IN, feature_align)
    HID_p = _round_up(HID, feature_align)
    OUT_p = _round_up(OUT, feature_align)

    def pad2(a, r, c):
        a = a.astype(compute_dtype)
        if a.shape == (r, c):
            return a
        return jnp.zeros((r, c), compute_dtype).at[:a.shape[0], :a.shape[1]].set(a)

    def pad_bias(b, c):
        b = b.astype(jnp.float32).reshape(1, -1)
        if b.shape[1] == c:
            return b
        return jnp.zeros((1, c), jnp.float32).at[:, :b.shape[1]].set(b)

    return dict(
        w1=pad2(w1, IN_p, HID_p), b1=pad_bias(b1, HID_p),
        w2=pad2(w2, HID_p, OUT_p), b2=pad_bias(b2, OUT_p),
        dims=(IN, HID, OUT), padded_dims=(IN_p, HID_p, OUT_p),
        compute_dtype=jnp.dtype(compute_dtype),
    )


def _vmem_budget_bytes():
    # Generation-aware budget: 128 MiB on v5e/v6e, 64 MiB on v7x, minus ~20% headroom.
    try:
        cap = int(pltpu.get_tpu_info().vmem_capacity_bytes)
    except Exception:
        cap = 64 * 1024 * 1024  # conservative floor (v7x per-TC VMEM)
    return int(cap * 0.80)


def mlp_forward(x, params, *, block_m=512, approx_gelu=False,
                force_hid_tiling=False, max_hid_tile=None, use_core_parallel=False):
    """x: (B, in). params: output of prepare_mlp_params. Returns (B, out) in x.dtype."""
    B, IN = x.shape
    IN0, HID, OUT = params["dims"]
    assert IN == IN0, f"x feature dim {IN} != prepared in_features {IN0}"
    IN_p, HID_p, OUT_p = params["padded_dims"]
    compute_dtype = params["compute_dtype"]
    out_dtype = x.dtype

    isz = compute_dtype.itemsize
    osz = jnp.dtype(out_dtype).itemsize
    sublane = 16 if isz == 2 else 8   # bf16 packs 16 rows per sublane group

    # Batch tile: minimize last-tile padding instead of rounding B up to a fixed tile.
    n_bt = max(1, _cdiv(B, block_m))
    tm = _round_up(_cdiv(B, n_bt), sublane)

    budget = _vmem_budget_bytes()

    # Honest VMEM accounting (includes the f32 intermediate h and the accumulator).
    def resident_need(tm_, w_buf):
        return (2 * tm_ * IN_p * isz + 2 * tm_ * OUT_p * osz        # pipelined x/out tiles
                + w_buf * (IN_p * HID_p + HID_p * OUT_p) * isz      # weights
                + w_buf * (HID_p + OUT_p) * 4                       # biases (f32)
                + tm_ * HID_p * 4 + tm_ * OUT_p * 4)                # live h / fc2 result (f32)

    def tiled_need(tm_, tk_):
        return (2 * tm_ * IN_p * isz + 2 * tm_ * OUT_p * osz
                + 2 * (IN_p * tk_ + tk_ * OUT_p) * isz              # W1/W2 tiles (dbl buf)
                + 2 * (tk_ + OUT_p) * 4                             # bias tiles
                + tm_ * OUT_p * 4                                   # f32 accumulator scratch
                + tm_ * tk_ * 4 + tm_ * OUT_p * 4)                  # live h / partial (f32)

    # Conservative fit check assumes double-buffered weights (Buffered(1) then only helps).
    use_resident = (not force_hid_tiling) and resident_need(tm, 2) <= budget

    tk = None
    if not use_resident:
        # Shrink the batch tile if even tk=128 doesn't fit the budget.
        while tm > sublane and tiled_need(tm, 128) > budget:
            tm = max(sublane, _round_up(tm // 2, sublane))
        # Largest hidden tile that is a multiple-of-128 divisor of HID_p, fits the budget,
        # and respects max_hid_tile.
        cap_tk = HID_p if max_hid_tile is None else min(HID_p, _round_up(max_hid_tile, 128))
        d = HID_p // 128
        tk = 128
        for m in range(1, d + 1):
            cand = m * 128
            if d % m == 0 and cand <= cap_tk and tiled_need(tm, cand) <= budget:
                tk = cand

    B_p = _round_up(B, tm)
    grid_b = B_p // tm

    # Pad x per call (params were padded once at setup); skip when already aligned.
    x_p = x.astype(compute_dtype)
    if x_p.shape != (B_p, IN_p):
        x_p = jnp.zeros((B_p, IN_p), compute_dtype).at[:B, :IN].set(x_p)

    flops = 2 * B_p * HID_p * (IN_p + OUT_p)
    bytes_accessed = (B_p * IN_p * isz + (IN_p * HID_p + HID_p * OUT_p) * isz
                      + (HID_p + OUT_p) * 4 + B_p * OUT_p * osz)
    cost = pl.CostEstimate(flops=flops, transcendentals=B_p * HID_p,
                           bytes_accessed=bytes_accessed)

    batch_sem = pltpu.CORE_PARALLEL if use_core_parallel else pltpu.PARALLEL
    args = (x_p, params["w1"], params["b1"], params["w2"], params["b2"])

    if use_resident:
        vmem_limit = int(min(budget, max(32 << 20, int(1.25 * resident_need(tm, 2)))))

        def build(single_buffer):
            def w_spec(shape):
                if single_buffer:
                    # Constant index_map -> single buffer halves resident-weight VMEM.
                    return pl.BlockSpec(shape, lambda i: (0, 0),
                                        pipeline_mode=pl.Buffered(1))
                return pl.BlockSpec(shape, lambda i: (0, 0))

            return pl.pallas_call(
                functools.partial(_mlp_resident_kernel, approx_gelu=approx_gelu),
                out_shape=jax.ShapeDtypeStruct((B_p, OUT_p), out_dtype),
                grid_spec=pltpu.PrefetchScalarGridSpec(
                    num_scalar_prefetch=0,
                    grid=(grid_b,),
                    in_specs=[
                        pl.BlockSpec((tm, IN_p), lambda i: (i, 0)),   # x tile marches
                        w_spec((IN_p, HID_p)),                        # W1 resident
                        w_spec((1, HID_p)),                           # b1 resident
                        w_spec((HID_p, OUT_p)),                       # W2 resident
                        w_spec((1, OUT_p)),                           # b2 resident
                    ],
                    out_specs=pl.BlockSpec((tm, OUT_p), lambda i: (i, 0)),
                ),
                compiler_params=pltpu.CompilerParams(
                    dimension_semantics=(batch_sem,),
                    vmem_limit_bytes=vmem_limit,
                ),
                cost_estimate=cost,
            )

        try:
            out_p = build(True)(*args)
        except Exception:
            # pl.Buffered(1) not supported on this jax/Mosaic version -> default buffering.
            out_p = build(False)(*args)
        return out_p[:B, :OUT]

    # ---- HID-tiled path: grid = (batch tiles, hidden tiles), f32 accumulator scratch ----
    grid_k = HID_p // tk
    vmem_limit = int(min(budget, max(32 << 20, int(1.25 * tiled_need(tm, tk)))))

    out_p = pl.pallas_call(
        functools.partial(_mlp_hid_tiled_kernel, approx_gelu=approx_gelu),
        out_shape=jax.ShapeDtypeStruct((B_p, OUT_p), out_dtype),
        grid_spec=pltpu.PrefetchScalarGridSpec(
            num_scalar_prefetch=0,
            grid=(grid_b, grid_k),
            in_specs=[
                pl.BlockSpec((tm, IN_p), lambda i, j: (i, 0)),    # x tile (constant over j)
                pl.BlockSpec((IN_p, tk), lambda i, j: (0, j)),    # W1 column tile
                pl.BlockSpec((1, tk), lambda i, j: (0, j)),       # b1 tile
                pl.BlockSpec((tk, OUT_p), lambda i, j: (j, 0)),   # W2 row tile
                pl.BlockSpec((1, OUT_p), lambda i, j: (0, 0)),    # b2 (constant)
            ],
            out_specs=pl.BlockSpec((tm, OUT_p), lambda i, j: (i, 0)),
            scratch_shapes=[pltpu.VMEM((tm, OUT_p), jnp.float32)],
        ),
        compiler_params=pltpu.CompilerParams(
            dimension_semantics=(batch_sem, pltpu.ARBITRARY),
            vmem_limit_bytes=vmem_limit,
        ),
        cost_estimate=cost,
    )(*args)

    return out_p[:B, :OUT]


if __name__ == "__main__":
    key = jax.random.PRNGKey(0)

    def init_params(k, IN, HID, OUT):
        k1, kb1, k2, kb2 = jax.random.split(k, 4)
        bound1 = 1.0 / jnp.sqrt(IN)
        bound2 = 1.0 / jnp.sqrt(HID)
        w1 = jax.random.uniform(k1, (IN, HID), jnp.float32, -bound1, bound1)
        b1 = jax.random.uniform(kb1, (HID,), jnp.float32, -bound1, bound1)
        w2 = jax.random.uniform(k2, (HID, OUT), jnp.float32, -bound2, bound2)
        b2 = jax.random.uniform(kb2, (OUT,), jnp.float32, -bound2, bound2)
        return w1, b1, w2, b2

    def ref_mlp(x, w1, b1, w2, b2, precision=None):
        h = jnp.dot(x, w1, precision=precision) + b1
        h = jax.nn.gelu(h, approximate=False)
        return jnp.dot(h, w2, precision=precision) + b2

    # ---- Test 1: small shapes, f32 operands, resident-weight path, tight check ----
    B, IN, HID, OUT = 8, 32, 64, 32
    kx, kp = jax.random.split(key)
    x = jax.random.normal(kx, (B, IN), dtype=jnp.float32)
    w1, b1, w2, b2 = init_params(kp, IN, HID, OUT)

    params_f32 = prepare_mlp_params(w1, b1, w2, b2, compute_dtype=jnp.float32)
    out = mlp_forward(x, params_f32)
    jax.block_until_ready(out)
    ref = ref_mlp(x, w1, b1, w2, b2)
    assert out.shape == ref.shape, "shape mismatch vs reference"
    assert jnp.allclose(out, ref, atol=1e-5, rtol=1e-5), "f32 resident path mismatch"

    # ---- Test 2: default bf16 MXU operands (f32 accumulation), looser tolerance ----
    params_bf16 = prepare_mlp_params(w1, b1, w2, b2)  # compute_dtype defaults to bf16
    out_bf16 = mlp_forward(x, params_bf16)
    jax.block_until_ready(out_bf16)
    assert jnp.allclose(out_bf16, ref, atol=5e-2, rtol=5e-2), "bf16 resident path mismatch"

    # ---- Test 3: forced hidden-dim tiling (3 HID tiles) exercising accumulate/finalize ----
    B2, IN2, HID2, OUT2 = 24, 48, 384, 40
    kx2, kp2 = jax.random.split(kp)
    x2 = jax.random.normal(kx2, (B2, IN2), dtype=jnp.float32)
    w1b, b1b, w2b, b2b = init_params(kp2, IN2, HID2, OUT2)
    params2 = prepare_mlp_params(w1b, b1b, w2b, b2b, compute_dtype=jnp.float32)
    out2 = mlp_forward(x2, params2, force_hid_tiling=True, max_hid_tile=128)
    jax.block_until_ready(out2)
    ref2 = ref_mlp(x2, w1b, b1b, w2b, b2b, precision=jax.lax.Precision.HIGHEST)
    assert out2.shape == ref2.shape, "shape mismatch vs reference (tiled)"
    assert jnp.allclose(out2, ref2, atol=2e-4, rtol=2e-4), "HID-tiled path mismatch"

    print("KERNEL_OK")
</pallas_src>

<mosaic_0001>
module attributes {stable_mosaic.version = 11 : i64} {
  func.func @_mlp_resident_kernel(%arg0: i32, %arg1: memref<8x128xf32, #tpu.memory_space<vmem>>, %arg2: memref<128x128xf32, #tpu.memory_space<vmem>>, %arg3: memref<1x128xf32, #tpu.memory_space<vmem>>, %arg4: memref<128x128xf32, #tpu.memory_space<vmem>>, %arg5: memref<1x128xf32, #tpu.memory_space<vmem>>, %arg6: memref<8x128xf32, #tpu.memory_space<vmem>>) attributes {dimension_semantics = [#tpu.dimension_semantics<parallel>], iteration_bounds = array<i64: 1>, scalar_prefetch = 0 : i64, scratch_operands = 0 : i64, tpu.core_type = #tpu.core_type<tc>, window_params = [{transform_indices = @transform_0, window_bounds = array<i64: 8, 128>}, {pipeline_mode = #tpu.pipeline_mode<synchronous>, transform_indices = @transform_1, window_bounds = array<i64: 128, 128>}, {pipeline_mode = #tpu.pipeline_mode<synchronous>, transform_indices = @transform_2, window_bounds = array<i64: 1, 128>}, {pipeline_mode = #tpu.pipeline_mode<synchronous>, transform_indices = @transform_3, window_bounds = array<i64: 128, 128>}, {pipeline_mode = #tpu.pipeline_mode<synchronous>, transform_indices = @transform_4, window_bounds = array<i64: 1, 128>}, {transform_indices = @transform_5, window_bounds = array<i64: 8, 128>}]} {
    %c0 = arith.constant 0 : index
    %c0_0 = arith.constant 0 : index
    %0 = vector.load %arg1[%c0, %c0_0] : memref<8x128xf32, #tpu.memory_space<vmem>>, vector<8x128xf32>
    %c0_1 = arith.constant 0 : index
    %c0_2 = arith.constant 0 : index
    %1 = vector.load %arg2[%c0_1, %c0_2] : memref<128x128xf32, #tpu.memory_space<vmem>>, vector<128x128xf32>
    %cst = arith.constant dense<0.000000e+00> : vector<8x128xf32>
    %2 = tpu.matmul %0, %1, %cst {dimension_numbers = #tpu.dot_dimension_numbers<[1], [0], [0], [1], [0, 0, 1, 1], [], []>} : vector<8x128xf32>, vector<128x128xf32>, vector<8x128xf32> -> vector<8x128xf32>
    %c0_3 = arith.constant 0 : index
    %c0_4 = arith.constant 0 : index
    %3 = vector.load %arg3[%c0_3, %c0_4] : memref<1x128xf32, #tpu.memory_space<vmem>>, vector<1x128xf32>
    %4 = vector.broadcast %3 : vector<1x128xf32> to vector<8x128xf32>
    %5 = arith.addf %2, %4 : vector<8x128xf32>
    %cst_5 = arith.constant 5.000000e-01 : f32
    %6 = vector.broadcast %cst_5 : f32 to vector<8x128xf32>
    %7 = arith.mulf %6, %5 : vector<8x128xf32>
    %cst_6 = arith.constant 0.707106769 : f32
    %8 = vector.broadcast %cst_6 : f32 to vector<8x128xf32>
    %9 = arith.mulf %5, %8 : vector<8x128xf32>
    %10 = math.erf %9 : vector<8x128xf32>
    %cst_7 = arith.constant 1.000000e+00 : f32
    %11 = vector.broadcast %cst_7 : f32 to vector<8x128xf32>
    %12 = arith.addf %11, %10 : vector<8x128xf32>
    %13 = arith.mulf %7, %12 : vector<8x128xf32>
    %c0_8 = arith.constant 0 : index
    %c0_9 = arith.constant 0 : index
    %14 = vector.load %arg4[%c0_8, %c0_9] : memref<128x128xf32, #tpu.memory_space<vmem>>, vector<128x128xf32>
    %cst_10 = arith.constant dense<0.000000e+00> : vector<8x128xf32>
    %15 = tpu.matmul %13, %14, %cst_10 {dimension_numbers = #tpu.dot_dimension_numbers<[1], [0], [0], [1], [0, 0, 1, 1], [], []>} : vector<8x128xf32>, vector<128x128xf32>, vector<8x128xf32> -> vector<8x128xf32>
    %c0_11 = arith.constant 0 : index
    %c0_12 = arith.constant 0 : index
    %16 = vector.load %arg5[%c0_11, %c0_12] : memref<1x128xf32, #tpu.memory_space<vmem>>, vector<1x128xf32>
    %17 = vector.broadcast %16 : vector<1x128xf32> to vector<8x128xf32>
    %18 = arith.addf %15, %17 : vector<8x128xf32>
    %c0_13 = arith.constant 0 : index
    %c0_14 = arith.constant 0 : index
    %19 = vector.load %arg6[%c0_13, %c0_14] : memref<8x128xf32, #tpu.memory_space<vmem>>, vector<8x128xf32>
    tpu.vector_store %arg6[%c0_13, %c0_14], %18 {strides = array<i32>} : memref<8x128xf32, #tpu.memory_space<vmem>>, vector<8x128xf32>,
    return
  }
  func.func @transform_0(%arg0: i32) -> (i32, i32) {
    %c0_i32 = arith.constant 0 : i32
    %c0_i32_0 = arith.constant 0 : i32
    return %arg0, %c0_i32 : i32, i32
  }
  func.func @transform_1(%arg0: i32) -> (i32, i32) {
    %c0_i32 = arith.constant 0 : i32
    %c0_i32_0 = arith.constant 0 : i32
    %c0_i32_1 = arith.constant 0 : i32
    return %c0_i32, %c0_i32_0 : i32, i32
  }
  func.func @transform_2(%arg0: i32) -> (i32, i32) {
    %c0_i32 = arith.constant 0 : i32
    %c0_i32_0 = arith.constant 0 : i32
    %c0_i32_1 = arith.constant 0 : i32
    return %c0_i32, %c0_i32_0 : i32, i32
  }
  func.func @transform_3(%arg0: i32) -> (i32, i32) {
    %c0_i32 = arith.constant 0 : i32
    %c0_i32_0 = arith.constant 0 : i32
    %c0_i32_1 = arith.constant 0 : i32
    return %c0_i32, %c0_i32_0 : i32, i32
  }
  func.func @transform_4(%arg0: i32) -> (i32, i32) {
    %c0_i32 = arith.constant 0 : i32
    %c0_i32_0 = arith.constant 0 : i32
    %c0_i32_1 = arith.constant 0 : i32
    return %c0_i32, %c0_i32_0 : i32, i32
  }
  func.func @transform_5(%arg0: i32) -> (i32, i32) {
    %c0_i32 = arith.constant 0 : i32
    %c0_i32_0 = arith.constant 0 : i32
    return %arg0, %c0_i32 : i32, i32
  }
}

module attributes {stable_mosaic.version = 11 : i64} {
  func.func @_mlp_resident_kernel(%arg0: i32, %arg1: memref<8x128xf32, #tpu.memory_space<vmem>>, %arg2: memref<128x128xf32, #tpu.memory_space<vmem>>, %arg3: memref<1x128xf32, #tpu.memory_space<vmem>>, %arg4: memref<128x128xf32, #tpu.memory_space<vmem>>, %arg5: memref<1x128xf32, #tpu.memory_space<vmem>>, %arg6: memref<8x128xf32, #tpu.memory_space<vmem>>) attributes {dimension_semantics = [#tpu.dimension_semantics<parallel>], iteration_bounds = array<i64: 1>, scalar_prefetch = 0 : i64, scratch_operands = 0 : i64, tpu.core_type = #tpu.core_type<tc>, window_params = [{transform_indices = @transform_0, window_bounds = array<i64: 8, 128>}, {pipeline_mode = #tpu.pipeline_mode<synchronous>, transform_indices = @transform_1, window_bounds = array<i64: 128, 128>}, {pipeline_mode = #tpu.pipeline_mode<synchronous>, transform_indices = @transform_2, window_bounds = array<i64: 1, 128>}, {pipeline_mode = #tpu.pipeline_mode<synchronous>, transform_indices = @transform_3, window_bounds = array<i64: 128, 128>}, {pipeline_mode = #tpu.pipeline_mode<synchronous>, transform_indices = @transform_4, window_bounds = array<i64: 1, 128>}, {transform_indices = @transform_5, window_bounds = array<i64: 8, 128>}]} {
    %c0 = arith.constant 0 : index
    %c0_0 = arith.constant 0 : index
    %0 = vector.load %arg1[%c0, %c0_0] : memref<8x128xf32, #tpu.memory_space<vmem>>, vector<8x128xf32>
    %c0_1 = arith.constant 0 : index
    %c0_2 = arith.constant 0 : index
    %1 = vector.load %arg2[%c0_1, %c0_2] : memref<128x128xf32, #tpu.memory_space<vmem>>, vector<128x128xf32>
    %cst = arith.constant dense<0.000000e+00> : vector<8x128xf32>
    %2 = tpu.matmul %0, %1, %cst {dimension_numbers = #tpu.dot_dimension_numbers<[1], [0], [0], [1], [0, 0, 1, 1], [], []>} : vector<8x128xf32>, vector<128x128xf32>, vector<8x128xf32> -> vector<8x128xf32>
    %c0_3 = arith.constant 0 : index
    %c0_4 = arith.constant 0 : index
    %3 = vector.load %arg3[%c0_3, %c0_4] : memref<1x128xf32, #tpu.memory_space<vmem>>, vector<1x128xf32>
    %4 = vector.broadcast %3 : vector<1x128xf32> to vector<8x128xf32>
    %5 = arith.addf %2, %4 : vector<8x128xf32>
    %cst_5 = arith.constant 5.000000e-01 : f32
    %6 = vector.broadcast %cst_5 : f32 to vector<8x128xf32>
    %7 = arith.mulf %6, %5 : vector<8x128xf32>
    %cst_6 = arith.constant 0.707106769 : f32
    %8 = vector.broadcast %cst_6 : f32 to vector<8x128xf32>
    %9 = arith.mulf %5, %8 : vector<8x128xf32>
    %10 = math.erf %9 : vector<8x128xf32>
    %cst_7 = arith.constant 1.000000e+00 : f32
    %11 = vector.broadcast %cst_7 : f32 to vector<8x128xf32>
    %12 = arith.addf %11, %10 : vector<8x128xf32>
    %13 = arith.mulf %7, %12 : vector<8x128xf32>
    %c0_8 = arith.constant 0 : index
    %c0_9 = arith.constant 0 : index
    %14 = vector.load %arg4[%c0_8, %c0_9] : memref<128x128xf32, #tpu.memory_space<vmem>>, vector<128x128xf32>
    %cst_10 = arith.constant dense<0.000000e+00> : vector<8x128xf32>
    %15 = tpu.matmul %13, %14, %cst_10 {dimension_numbers = #tpu.dot_dimension_numbers<[1], [0], [0], [1], [0, 0, 1, 1], [], []>} : vector<8x128xf32>, vector<128x128xf32>, vector<8x128xf32> -> vector<8x128xf32>
    %c0_11 = arith.constant 0 : index
    %c0_12 = arith.constant 0 : index
    %16 = vector.load %arg5[%c0_11, %c0_12] : memref<1x128xf32, #tpu.memory_space<vmem>>, vector<1x128xf32>
    %17 = vector.broadcast %16 : vector<1x128xf32> to vector<8x128xf32>
    %18 = arith.addf %15, %17 : vector<8x128xf32>
    %c0_13 = arith.constant 0 : index
    %c0_14 = arith.constant 0 : index
    %19 = vector.load %arg6[%c0_13, %c0_14] : memref<8x128xf32, #tpu.memory_space<vmem>>, vector<8x128xf32>
    tpu.vector_store %arg6[%c0_13, %c0_14], %18 {strides = array<i32>} : memref<8x128xf32, #tpu.memory_space<vmem>>, vector<8x128xf32>,
    return
  }
  func.func @transform_0(%arg0: i32) -> (i32, i32) {
    %c0_i32 = arith.constant 0 : i32
    %c0_i32_0 = arith.constant 0 : i32
    return %arg0, %c0_i32 : i32, i32
  }
  func.func @transform_1(%arg0: i32) -> (i32, i32) {
    %c0_i32 = arith.constant 0 : i32
    %c0_i32_0 = arith.constant 0 : i32
    %c0_i32_1 = arith.constant 0 : i32
    return %c0_i32, %c0_i32_0 : i32, i32
  }
  func.func @transform_2(%arg0: i32) -> (i32, i32) {
    %c0_i32 = arith.constant 0 : i32
    %c0_i32_0 = arith.constant 0 : i32
    %c0_i32_1 = arith.constant 0 : i32
    return %c0_i32, %c0_i32_0 : i32, i32
  }
  func.func @transform_3(%arg0: i32) -> (i32, i32) {
    %c0_i32 = arith.constant 0 : i32
    %c0_i32_0 = arith.constant 0 : i32
    %c0_i32_1 = arith.constant 0 : i32
    return %c0_i32, %c0_i32_0 : i32, i32
  }
  func.func @transform_4(%arg0: i32) -> (i32, i32) {
    %c0_i32 = arith.constant 0 : i32
    %c0_i32_0 = arith.constant 0 : i32
    %c0_i32_1 = arith.constant 0 : i32
    return %c0_i32, %c0_i32_0 : i32, i32
  }
  func.func @transform_5(%arg0: i32) -> (i32, i32) {
    %c0_i32 = arith.constant 0 : i32
    %c0_i32_0 = arith.constant 0 : i32
    return %arg0, %c0_i32 : i32, i32
  }
}

</mosaic_0001>

<llo_original>
// kernel: tpu_custom_call.1
$region0: #{tpu_custom_call.1}
  #allocation0 [shape = 'u32[]', space=smem, size = 0x4, offset = 0x4, fixed_abs, tag = 'smem constant byte address 0x4 - core index']
  #allocation1 [shape = 'u32[72,128]{1,0:T(1,128)}', space=vmem, size = 0x9000, scoped, tag = 'internal scratch']
  %s0 = inlined_call_operand.hbm [shape: f32[8,128], index: 0, kind: input, shape index: {}]
  %s1 = inlined_call_operand.hbm [shape: f32[128,128], index: 1, kind: input, shape index: {}]
  %s2 = inlined_call_operand.vmem [shape: f32[1,128], index: 2, kind: input, shape index: {}]
  %s3 = inlined_call_operand.hbm [shape: f32[128,128], index: 3, kind: input, shape index: {}]
  %s4 = inlined_call_operand.vmem [shape: f32[1,128], index: 4, kind: input, shape index: {}]
  %s5 = inlined_call_operand.hbm [shape: f32[8,128], index: 5, kind: output, shape index: {}]
  %s6 = sld [smem:[#allocation0]]
  $region42: #{tpu_custom_call.1} parent=0
    _
  %s8 = ssub.s32 1, %s6
  %s9 = scalar_select 0, %s8, %s6
  $region1: #{tpu_custom_call.1} parent=0
    #allocation2 [shape = 'u8[4096]{0}', space=vmem, size = 0x1000, scoped, tag = 'input window, operand 0, single buffered']
    #allocation3 [shape = 's32[1]{0}', space=sflag, size = 0x4, scoped, tag = 'scoped memory for tpu_custom_call.1']
    #allocation4 [shape = 's32[1]{0}', space=sflag, size = 0x4, scoped, tag = 'scoped memory for tpu_custom_call.1']
    #allocation5 [shape = 'u8[65536]{0}', space=vmem, size = 0x10000, scoped, tag = 'input window, operand 1, single buffered']
    #allocation6 [shape = 's32[1]{0}', space=sflag, size = 0x4, scoped, tag = 'scoped memory for tpu_custom_call.1']
    #allocation7 [shape = 'u8[65536]{0}', space=vmem, size = 0x10000, scoped, tag = 'input window, operand 3, single buffered']
    #allocation8 [shape = 'u8[4096]{0}', space=vmem, size = 0x1000, scoped, tag = 'output window, operand 0, single buffered']
    %10 = vsyncpa [#allocation3], 0
    %11 = vsyncpa [#allocation6], 0
    %12 = vsyncpa [#allocation4], 0
    // Predicated region
    $region2: #{tpu_custom_call.1} parent=1 // pred_check
      _
    $region3: #{tpu_custom_call.1} parent=1 // pred_check_branch
      %14 = sbr.rel (0) target = $region5
    $region4: #{tpu_custom_call.1} parent=1 // pred_region
      %16 = vsyncadd [#allocation3], 0
      %s18 = sshll.u32 %s0, 4
      %s19 = int_to_ptr.hbm [resolvable:$true] %s18
      %s20 = sshll.u32 [#allocation2], 4
      %s21 = int_to_ptr.vmem [resolvable:$true] %s20
      %23 = dma.hbm_to_vmem [thread:$0]  %s19, 128, %s21, [#allocation3]
    $region5: #{tpu_custom_call.1} parent=1 // pred_fallthru
      _
    // Predicated region
    $region6: #{tpu_custom_call.1} parent=1 // pred_check
      _
    $region7: #{tpu_custom_call.1} parent=1 // pred_check_branch
      %25 = sbr.rel (0) target = $region9
    $region8: #{tpu_custom_call.1} parent=1 // pred_region
      %27 = vsyncadd [#allocation6], 0
      %s28 = sshll.u32 %s1, 4
      %s29 = int_to_ptr.hbm [resolvable:$true] %s28
      %s30 = sshll.u32 [#allocation5], 4
      %s31 = int_to_ptr.vmem [resolvable:$true] %s30
      %36 = dma.hbm_to_vmem [thread:$0]  %s29, 2048, %s31, [#allocation6], 128, 128, 8
    $region9: #{tpu_custom_call.1} parent=1 // pred_fallthru
      _
    // Predicated region
    $region10: #{tpu_custom_call.1} parent=1 // pred_check
      _
    $region11: #{tpu_custom_call.1} parent=1 // pred_check_branch
      %38 = sbr.rel (0) target = $region13
    $region12: #{tpu_custom_call.1} parent=1 // pred_region
      _
    $region13: #{tpu_custom_call.1} parent=1 // pred_fallthru
      _
    // Predicated region
    $region14: #{tpu_custom_call.1} parent=1 // pred_check
      _
    $region15: #{tpu_custom_call.1} parent=1 // pred_check_branch
      %40 = sbr.rel (0) target = $region17
    $region16: #{tpu_custom_call.1} parent=1 // pred_region
      %42 = vsyncadd [#allocation6], 0
      %s43 = sshll.u32 %s3, 4
      %s44 = int_to_ptr.hbm [resolvable:$true] %s43
      %s45 = sshll.u32 [#allocation7], 4
      %s46 = int_to_ptr.vmem [resolvable:$true] %s45
      %51 = dma.hbm_to_vmem [thread:$0]  %s44, 2048, %s46, [#allocation6], 128, 128, 8
    $region17: #{tpu_custom_call.1} parent=1 // pred_fallthru
      _
    // Predicated region
    $region18: #{tpu_custom_call.1} parent=1 // pred_check
      _
    $region19: #{tpu_custom_call.1} parent=1 // pred_check_branch
      %53 = sbr.rel (0) target = $region21
    $region20: #{tpu_custom_call.1} parent=1 // pred_region
      _
    $region21: #{tpu_custom_call.1} parent=1 // pred_fallthru
      _
    // Predicated region
    $region22: #{tpu_custom_call.1} parent=1 // pred_check
      _
    $region23: #{tpu_custom_call.1} parent=1 // pred_check_branch
      %55 = sbr.rel (0) target = $region25
    $region24: #{tpu_custom_call.1} parent=1 // pred_region
      %57 = dma.done [#allocation3], 128
    $region25: #{tpu_custom_call.1} parent=1 // pred_fallthru
      _
    // Predicated region
    $region26: #{tpu_custom_call.1} parent=1 // pred_check
      _
    $region27: #{tpu_custom_call.1} parent=1 // pred_check_branch
      %59 = sbr.rel (0) target = $region29
    $region28: #{tpu_custom_call.1} parent=1 // pred_region
      %61 = dma.done [#allocation6], 2048
    $region29: #{tpu_custom_call.1} parent=1 // pred_fallthru
      _
    // Predicated region
    $region30: #{tpu_custom_call.1} parent=1 // pred_check
      _
    $region31: #{tpu_custom_call.1} parent=1 // pred_check_branch
      %63 = sbr.rel (0) target = $region33
    $region32: #{tpu_custom_call.1} parent=1 // pred_region
      %65 = dma.done [#allocation6], 2048
    $region33: #{tpu_custom_call.1} parent=1 // pred_fallthru
      _
    %v66 = vld [vmem:[#allocation2] sm:$0xff]
    %v67 = vld [vmem:[#allocation5] sm:$0xff]
    %v68 = vld [vmem:[#allocation5 + $0x8] sm:$0xff]
    %v69 = vld [vmem:[#allocation5 + $0x10] sm:$0xff]
    %v70 = vld [vmem:[#allocation5 + $0x18] sm:$0xff]
    %v71 = vld [vmem:[#allocation5 + $0x20] sm:$0xff]
    %v72 = vld [vmem:[#allocation5 + $0x28] sm:$0xff]
    %v73 = vld [vmem:[#allocation5 + $0x30] sm:$0xff]
    %v74 = vld [vmem:[#allocation5 + $0x38] sm:$0xff]
    %v75 = vld [vmem:[#allocation5 + $0x40] sm:$0xff]
    %v76 = vld [vmem:[#allocation5 + $0x48] sm:$0xff]
    %v77 = vld [vmem:[#allocation5 + $0x50] sm:$0xff]
    %v78 = vld [vmem:[#allocation5 + $0x58] sm:$0xff]
    %v79 = vld [vmem:[#allocation5 + $0x60] sm:$0xff]
    %v80 = vld [vmem:[#allocation5 + $0x68] sm:$0xff]
    %v81 = vld [vmem:[#allocation5 + $0x70] sm:$0xff]
    %v82 = vld [vmem:[#allocation5 + $0x78] sm:$0xff]
    %v83 = vld [vmem:[%s2] sm:$0x1]
    %v85 = vperm.slane %v83, 0
    %87 = vmatpush.msra.mxu0 %v82
    %88 = vmatpush.msra.mxu0 %v81
    %89 = vmatpush.msra.mxu0 %v80
    %90 = vmatpush.msra.mxu0 %v79
    %91 = vmatpush.msra.mxu0 %v78
    %92 = vmatpush.msra.mxu0 %v77
    %93 = vmatpush.msra.mxu0 %v76
    %94 = vmatpush.msra.mxu0 %v75
    %95 = vmatpush.msra.mxu0 %v74
    %96 = vmatpush.msra.mxu0 %v73
    %97 = vmatpush.msra.mxu0 %v72
    %98 = vmatpush.msra.mxu0 %v71
    %99 = vmatpush.msra.mxu0 %v70
    %100 = vmatpush.msra.mxu0 %v69
    %101 = vmatpush.msra.mxu0 %v68
    %102 = vmatpush.msra.mxu0 %v67
    %103 = vmatmul.f32.gmra.mxu0 %v66
    %v104 = vpop.f32.mrf.mxu0
    %v105 = vadd.f32 %v85, %v104
    %106 = vdwg.mxu0
    %v107 = vmul.f32 %v105, 0.5
    %v108 = vmul.f32 %v105, 0.70710677
    %v109 = vmul.f32 %v108, %v108
    %v110 = vmin.f32 16.0, %v109
    %v111 = vmul.f32 %v110, 2.1237322e-06
    %v112 = vadd.f32 %v111, 0.00028619796
    %v113 = vmul.f32 %v110, %v112
    %v114 = vadd.f32 %v113, 0.0036580483
    %v115 = vmul.f32 %v110, %v114
    %v116 = vadd.f32 %v115, 0.05243302
    %v117 = vmul.f32 %v110, %v116
    %v118 = vadd.f32 %v117, 0.18741608
    %v119 = vmul.f32 %v110, %v118
    %v120 = vadd.f32 %v119, 1.1283791
    %v121 = vmul.f32 %v108, %v120
    %v122 = vmul.f32 %v110, 3.8918573e-05
    %v123 = vadd.f32 %v122, 0.001143296
    %v124 = vmul.f32 %v110, %v123
    %v125 = vadd.f32 %v124, 0.014752088
    %v126 = vmul.f32 %v110, %v125
    %v127 = vadd.f32 %v126, 0.112945676
    %v128 = vmul.f32 %v110, %v127
    %v129 = vadd.f32 %v128, 0.4994258
    %v130 = vmul.f32 %v110, %v129
    %v131 = vadd.f32 %v130, 1.0
    %v132 = vrcp.pop %v131
    %v133 = vmul.f32 %v131, %v132
    %v134 = vsub.f32 1.0, %v133
    %v135 = vmul.f32 %v132, %v134
    %v136 = vadd.f32 %v132, %v135
    %vm137 = vweird.f32 %v131
    %vm138 = vweird.f32 %v132
    %vm139 = vmor %vm137, %vm138
    %v140 = vsel %vm139, %v132, %v136
    %v141 = vand.u32 2147483647, %v131
    %vm142 = vcmp.eq.f32.partialorder %v141, 8.507059e+37
    %v143 = vand.u32 %v131, 2147483648
    %v144 = vor.u32 1.1754944e-38, %v143
    %v145 = vsel %vm142, %v144, %v140
    %v146 = vmul.f32 %v121, %v145
    %v147 = vmin.f32 %v146, 1.0
    %v148 = vmax.f32 %v147, -1.0
    %v149 = vadd.f32 %v148, 1.0
    %v150 = vmul.f32 %v107, %v149
    %v151 = vld [vmem:[#allocation7] sm:$0xff]
    %v152 = vld [vmem:[#allocation7 + $0x8] sm:$0xff]
    %v153 = vld [vmem:[#allocation7 + $0x10] sm:$0xff]
    %v154 = vld [vmem:[#allocation7 + $0x18] sm:$0xff]
    %v155 = vld [vmem:[#allocation7 + $0x20] sm:$0xff]
    %v156 = vld [vmem:[#allocation7 + $0x28] sm:$0xff]
    %v157 = vld [vmem:[#allocation7 + $0x30] sm:$0xff]
    %v158 = vld [vmem:[#allocation7 + $0x38] sm:$0xff]
    %v159 = vld [vmem:[#allocation7 + $0x40] sm:$0xff]
    %v160 = vld [vmem:[#allocation7 + $0x48] sm:$0xff]
    %v161 = vld [vmem:[#allocation7 + $0x50] sm:$0xff]
    %v162 = vld [vmem:[#allocation7 + $0x58] sm:$0xff]
    %v163 = vld [vmem:[#allocation7 + $0x60] sm:$0xff]
    %v164 = vld [vmem:[#allocation7 + $0x68] sm:$0xff]
    %v165 = vld [vmem:[#allocation7 + $0x70] sm:$0xff]
    %v166 = vld [vmem:[#allocation7 + $0x78] sm:$0xff]
    %v167 = vld [vmem:[%s4] sm:$0x1]
    %v169 = vperm.slane %v167, 0
    %171 = vmatpush.msra.mxu0 %v166
    %172 = vmatpush.msra.mxu0 %v165
    %173 = vmatpush.msra.mxu0 %v164
    %174 = vmatpush.msra.mxu0 %v163
    %175 = vmatpush.msra.mxu0 %v162
    %176 = vmatpush.msra.mxu0 %v161
    %177 = vmatpush.msra.mxu0 %v160
    %178 = vmatpush.msra.mxu0 %v159
    %179 = vmatpush.msra.mxu0 %v158
    %180 = vmatpush.msra.mxu0 %v157
    %181 = vmatpush.msra.mxu0 %v156
    %182 = vmatpush.msra.mxu0 %v155
    %183 = vmatpush.msra.mxu0 %v154
    %184 = vmatpush.msra.mxu0 %v153
    %185 = vmatpush.msra.mxu0 %v152
    %186 = vmatpush.msra.mxu0 %v151
    %187 = vmatmul.f32.gmra.mxu0 %v150
    %v188 = vpop.f32.mrf.mxu0
    %v189 = vadd.f32 %v169, %v188
    %190 = vdwg.mxu0
    %191 = vst [vmem:[#allocation8] sm:$0xff] %v189
    // Predicated region
    $region34: #{tpu_custom_call.1} parent=1 // pred_check
      _
    $region35: #{tpu_custom_call.1} parent=1 // pred_check_branch
      %193 = sbr.rel (0) target = $region37
    $region36: #{tpu_custom_call.1} parent=1 // pred_region
      %195 = vsyncadd [#allocation4], 0
      %s197 = sshll.u32 [#allocation8], 4
      %s198 = int_to_ptr.vmem [resolvable:$true] %s197
      %s199 = sshll.u32 %s5, 4
      %s200 = int_to_ptr.hbm [resolvable:$true] %s199
      %202 = dma.vmem_to_hbm [thread:$0]  %s198, 128, %s200, [#allocation4]
    $region37: #{tpu_custom_call.1} parent=1 // pred_fallthru
      _
    // Predicated region
    $region38: #{tpu_custom_call.1} parent=1 // pred_check
      _
    $region39: #{tpu_custom_call.1} parent=1 // pred_check_branch
      %204 = sbr.rel (0) target = $region41
    $region40: #{tpu_custom_call.1} parent=1 // pred_region
      %206 = dma.done [#allocation4], 128
    $region41: #{tpu_custom_call.1} parent=1 // pred_fallthru
      _
    %207 = vsyncpa [#allocation3], 1
    %208 = vsyncpa [#allocation6], 1
    %209 = vsyncpa [#allocation4], 1

// kernel: tpu_custom_call.1
$region0: #{tpu_custom_call.1}
  #allocation0 [shape = 'u32[]', space=smem, size = 0x4, offset = 0x4, fixed_abs, tag = 'smem constant byte address 0x4 - core index']
  #allocation1 [shape = 'u32[72,128]{1,0:T(1,128)}', space=vmem, size = 0x9000, scoped, tag = 'internal scratch']
  %s0 = inlined_call_operand.hbm [shape: f32[8,128], index: 0, kind: input, shape index: {}]
  %s1 = inlined_call_operand.hbm [shape: f32[128,128], index: 1, kind: input, shape index: {}]
  %s2 = inlined_call_operand.vmem [shape: f32[1,128], index: 2, kind: input, shape index: {}]
  %s3 = inlined_call_operand.hbm [shape: f32[128,128], index: 3, kind: input, shape index: {}]
  %s4 = inlined_call_operand.vmem [shape: f32[1,128], index: 4, kind: input, shape index: {}]
  %s5 = inlined_call_operand.hbm [shape: f32[8,128], index: 5, kind: output, shape index: {}]
  %s6 = sld [smem:[#allocation0]]
  $region42: #{tpu_custom_call.1} parent=0
    _
  %s8 = ssub.s32 1, %s6
  %s9 = scalar_select 0, %s8, %s6
  $region1: #{tpu_custom_call.1} parent=0
    #allocation2 [shape = 'u8[4096]{0}', space=vmem, size = 0x1000, scoped, tag = 'input window, operand 0, single buffered']
    #allocation3 [shape = 's32[1]{0}', space=sflag, size = 0x4, scoped, tag = 'scoped memory for tpu_custom_call.1']
    #allocation4 [shape = 's32[1]{0}', space=sflag, size = 0x4, scoped, tag = 'scoped memory for tpu_custom_call.1']
    #allocation5 [shape = 'u8[65536]{0}', space=vmem, size = 0x10000, scoped, tag = 'input window, operand 1, single buffered']
    #allocation6 [shape = 's32[1]{0}', space=sflag, size = 0x4, scoped, tag = 'scoped memory for tpu_custom_call.1']
    #allocation7 [shape = 'u8[65536]{0}', space=vmem, size = 0x10000, scoped, tag = 'input window, operand 3, single buffered']
    #allocation8 [shape = 'u8[4096]{0}', space=vmem, size = 0x1000, scoped, tag = 'output window, operand 0, single buffered']
    %10 = vsyncpa [#allocation3], 0
    %11 = vsyncpa [#allocation6], 0
    %12 = vsyncpa [#allocation4], 0
    // Predicated region
    $region2: #{tpu_custom_call.1} parent=1 // pred_check
      _
    $region3: #{tpu_custom_call.1} parent=1 // pred_check_branch
      %14 = sbr.rel (0) target = $region5
    $region4: #{tpu_custom_call.1} parent=1 // pred_region
      %16 = vsyncadd [#allocation3], 0
      %s18 = sshll.u32 %s0, 4
      %s19 = int_to_ptr.hbm [resolvable:$true] %s18
      %s20 = sshll.u32 [#allocation2], 4
      %s21 = int_to_ptr.vmem [resolvable:$true] %s20
      %23 = dma.hbm_to_vmem [thread:$0]  %s19, 128, %s21, [#allocation3]
    $region5: #{tpu_custom_call.1} parent=1 // pred_fallthru
      _
    // Predicated region
    $region6: #{tpu_custom_call.1} parent=1 // pred_check
      _
    $region7: #{tpu_custom_call.1} parent=1 // pred_check_branch
      %25 = sbr.rel (0) target = $region9
    $region8: #{tpu_custom_call.1} parent=1 // pred_region
      %27 = vsyncadd [#allocation6], 0
      %s28 = sshll.u32 %s1, 4
      %s29 = int_to_ptr.hbm [resolvable:$true] %s28
      %s30 = sshll.u32 [#allocation5], 4
      %s31 = int_to_ptr.vmem [resolvable:$true] %s30
      %36 = dma.hbm_to_vmem [thread:$0]  %s29, 2048, %s31, [#allocation6], 128, 128, 8
    $region9: #{tpu_custom_call.1} parent=1 // pred_fallthru
      _
    // Predicated region
    $region10: #{tpu_custom_call.1} parent=1 // pred_check
      _
    $region11: #{tpu_custom_call.1} parent=1 // pred_check_branch
      %38 = sbr.rel (0) target = $region13
    $region12: #{tpu_custom_call.1} parent=1 // pred_region
      _
    $region13: #{tpu_custom_call.1} parent=1 // pred_fallthru
      _
    // Predicated region
    $region14: #{tpu_custom_call.1} parent=1 // pred_check
      _
    $region15: #{tpu_custom_call.1} parent=1 // pred_check_branch
      %40 = sbr.rel (0) target = $region17
    $region16: #{tpu_custom_call.1} parent=1 // pred_region
      %42 = vsyncadd [#allocation6], 0
      %s43 = sshll.u32 %s3, 4
      %s44 = int_to_ptr.hbm [resolvable:$true] %s43
      %s45 = sshll.u32 [#allocation7], 4
      %s46 = int_to_ptr.vmem [resolvable:$true] %s45
      %51 = dma.hbm_to_vmem [thread:$0]  %s44, 2048, %s46, [#allocation6], 128, 128, 8
    $region17: #{tpu_custom_call.1} parent=1 // pred_fallthru
      _
    // Predicated region
    $region18: #{tpu_custom_call.1} parent=1 // pred_check
      _
    $region19: #{tpu_custom_call.1} parent=1 // pred_check_branch
      %53 = sbr.rel (0) target = $region21
    $region20: #{tpu_custom_call.1} parent=1 // pred_region
      _
    $region21: #{tpu_custom_call.1} parent=1 // pred_fallthru
      _
    // Predicated region
    $region22: #{tpu_custom_call.1} parent=1 // pred_check
      _
    $region23: #{tpu_custom_call.1} parent=1 // pred_check_branch
      %55 = sbr.rel (0) target = $region25
    $region24: #{tpu_custom_call.1} parent=1 // pred_region
      %57 = dma.done [#allocation3], 128
    $region25: #{tpu_custom_call.1} parent=1 // pred_fallthru
      _
    // Predicated region
    $region26: #{tpu_custom_call.1} parent=1 // pred_check
      _
    $region27: #{tpu_custom_call.1} parent=1 // pred_check_branch
      %59 = sbr.rel (0) target = $region29
    $region28: #{tpu_custom_call.1} parent=1 // pred_region
      %61 = dma.done [#allocation6], 2048
    $region29: #{tpu_custom_call.1} parent=1 // pred_fallthru
      _
    // Predicated region
    $region30: #{tpu_custom_call.1} parent=1 // pred_check
      _
    $region31: #{tpu_custom_call.1} parent=1 // pred_check_branch
      %63 = sbr.rel (0) target = $region33
    $region32: #{tpu_custom_call.1} parent=1 // pred_region
      %65 = dma.done [#allocation6], 2048
    $region33: #{tpu_custom_call.1} parent=1 // pred_fallthru
      _
    %v66 = vld [vmem:[#allocation2] sm:$0xff]
    %v67 = vld [vmem:[#allocation5] sm:$0xff]
    %v68 = vld [vmem:[#allocation5 + $0x8] sm:$0xff]
    %v69 = vld [vmem:[#allocation5 + $0x10] sm:$0xff]
    %v70 = vld [vmem:[#allocation5 + $0x18] sm:$0xff]
    %v71 = vld [vmem:[#allocation5 + $0x20] sm:$0xff]
    %v72 = vld [vmem:[#allocation5 + $0x28] sm:$0xff]
    %v73 = vld [vmem:[#allocation5 + $0x30] sm:$0xff]
    %v74 = vld [vmem:[#allocation5 + $0x38] sm:$0xff]
    %v75 = vld [vmem:[#allocation5 + $0x40] sm:$0xff]
    %v76 = vld [vmem:[#allocation5 + $0x48] sm:$0xff]
    %v77 = vld [vmem:[#allocation5 + $0x50] sm:$0xff]
    %v78 = vld [vmem:[#allocation5 + $0x58] sm:$0xff]
    %v79 = vld [vmem:[#allocation5 + $0x60] sm:$0xff]
    %v80 = vld [vmem:[#allocation5 + $0x68] sm:$0xff]
    %v81 = vld [vmem:[#allocation5 + $0x70] sm:$0xff]
    %v82 = vld [vmem:[#allocation5 + $0x78] sm:$0xff]
    %v83 = vld [vmem:[%s2] sm:$0x1]
    %v85 = vperm.slane %v83, 0
    %87 = vmatpush.msra.mxu0 %v82
    %88 = vmatpush.msra.mxu0 %v81
    %89 = vmatpush.msra.mxu0 %v80
    %90 = vmatpush.msra.mxu0 %v79
    %91 = vmatpush.msra.mxu0 %v78
    %92 = vmatpush.msra.mxu0 %v77
    %93 = vmatpush.msra.mxu0 %v76
    %94 = vmatpush.msra.mxu0 %v75
    %95 = vmatpush.msra.mxu0 %v74
    %96 = vmatpush.msra.mxu0 %v73
    %97 = vmatpush.msra.mxu0 %v72
    %98 = vmatpush.msra.mxu0 %v71
    %99 = vmatpush.msra.mxu0 %v70
    %100 = vmatpush.msra.mxu0 %v69
    %101 = vmatpush.msra.mxu0 %v68
    %102 = vmatpush.msra.mxu0 %v67
    %103 = vmatmul.f32.gmra.mxu0 %v66
    %v104 = vpop.f32.mrf.mxu0
    %v105 = vadd.f32 %v85, %v104
    %106 = vdwg.mxu0
    %v107 = vmul.f32 %v105, 0.5
    %v108 = vmul.f32 %v105, 0.70710677
    %v109 = vmul.f32 %v108, %v108
    %v110 = vmin.f32 16.0, %v109
    %v111 = vmul.f32 %v110, 2.1237322e-06
    %v112 = vadd.f32 %v111, 0.00028619796
    %v113 = vmul.f32 %v110, %v112
    %v114 = vadd.f32 %v113, 0.0036580483
    %v115 = vmul.f32 %v110, %v114
    %v116 = vadd.f32 %v115, 0.05243302
    %v117 = vmul.f32 %v110, %v116
    %v118 = vadd.f32 %v117, 0.18741608
    %v119 = vmul.f32 %v110, %v118
    %v120 = vadd.f32 %v119, 1.1283791
    %v121 = vmul.f32 %v108, %v120
    %v122 = vmul.f32 %v110, 3.8918573e-05
    %v123 = vadd.f32 %v122, 0.001143296
    %v124 = vmul.f32 %v110, %v123
    %v125 = vadd.f32 %v124, 0.014752088
    %v126 = vmul.f32 %v110, %v125
    %v127 = vadd.f32 %v126, 0.112945676
    %v128 = vmul.f32 %v110, %v127
    %v129 = vadd.f32 %v128, 0.4994258
    %v130 = vmul.f32 %v110, %v129
    %v131 = vadd.f32 %v130, 1.0
    %v132 = vrcp.pop %v131
    %v133 = vmul.f32 %v131, %v132
    %v134 = vsub.f32 1.0, %v133
    %v135 = vmul.f32 %v132, %v134
    %v136 = vadd.f32 %v132, %v135
    %vm137 = vweird.f32 %v131
    %vm138 = vweird.f32 %v132
    %vm139 = vmor %vm137, %vm138
    %v140 = vsel %vm139, %v132, %v136
    %v141 = vand.u32 2147483647, %v131
    %vm142 = vcmp.eq.f32.partialorder %v141, 8.507059e+37
    %v143 = vand.u32 %v131, 2147483648
    %v144 = vor.u32 1.1754944e-38, %v143
    %v145 = vsel %vm142, %v144, %v140
    %v146 = vmul.f32 %v121, %v145
    %v147 = vmin.f32 %v146, 1.0
    %v148 = vmax.f32 %v147, -1.0
    %v149 = vadd.f32 %v148, 1.0
    %v150 = vmul.f32 %v107, %v149
    %v151 = vld [vmem:[#allocation7] sm:$0xff]
    %v152 = vld [vmem:[#allocation7 + $0x8] sm:$0xff]
    %v153 = vld [vmem:[#allocation7 + $0x10] sm:$0xff]
    %v154 = vld [vmem:[#allocation7 + $0x18] sm:$0xff]
    %v155 = vld [vmem:[#allocation7 + $0x20] sm:$0xff]
    %v156 = vld [vmem:[#allocation7 + $0x28] sm:$0xff]
    %v157 = vld [vmem:[#allocation7 + $0x30] sm:$0xff]
    %v158 = vld [vmem:[#allocation7 + $0x38] sm:$0xff]
    %v159 = vld [vmem:[#allocation7 + $0x40] sm:$0xff]
    %v160 = vld [vmem:[#allocation7 + $0x48] sm:$0xff]
    %v161 = vld [vmem:[#allocation7 + $0x50] sm:$0xff]
    %v162 = vld [vmem:[#allocation7 + $0x58] sm:$0xff]
    %v163 = vld [vmem:[#allocation7 + $0x60] sm:$0xff]
    %v164 = vld [vmem:[#allocation7 + $0x68] sm:$0xff]
    %v165 = vld [vmem:[#allocation7 + $0x70] sm:$0xff]
    %v166 = vld [vmem:[#allocation7 + $0x78] sm:$0xff]
    %v167 = vld [vmem:[%s4] sm:$0x1]
    %v169 = vperm.slane %v167, 0
    %171 = vmatpush.msra.mxu0 %v166
    %172 = vmatpush.msra.mxu0 %v165
    %173 = vmatpush.msra.mxu0 %v164
    %174 = vmatpush.msra.mxu0 %v163
    %175 = vmatpush.msra.mxu0 %v162
    %176 = vmatpush.msra.mxu0 %v161
    %177 = vmatpush.msra.mxu0 %v160
    %178 = vmatpush.msra.mxu0 %v159
    %179 = vmatpush.msra.mxu0 %v158
    %180 = vmatpush.msra.mxu0 %v157
    %181 = vmatpush.msra.mxu0 %v156
    %182 = vmatpush.msra.mxu0 %v155
    %183 = vmatpush.msra.mxu0 %v154
    %184 = vmatpush.msra.mxu0 %v153
    %185 = vmatpush.msra.mxu0 %v152
    %186 = vmatpush.msra.mxu0 %v151
    %187 = vmatmul.f32.gmra.mxu0 %v150
    %v188 = vpop.f32.mrf.mxu0
    %v189 = vadd.f32 %v169, %v188
    %190 = vdwg.mxu0
    %191 = vst [vmem:[#allocation8] sm:$0xff] %v189
    // Predicated region
    $region34: #{tpu_custom_call.1} parent=1 // pred_check
      _
    $region35: #{tpu_custom_call.1} parent=1 // pred_check_branch
      %193 = sbr.rel (0) target = $region37
    $region36: #{tpu_custom_call.1} parent=1 // pred_region
      %195 = vsyncadd [#allocation4], 0
      %s197 = sshll.u32 [#allocation8], 4
      %s198 = int_to_ptr.vmem [resolvable:$true] %s197
      %s199 = sshll.u32 %s5, 4
      %s200 = int_to_ptr.hbm [resolvable:$true] %s199
      %202 = dma.vmem_to_hbm [thread:$0]  %s198, 128, %s200, [#allocation4]
    $region37: #{tpu_custom_call.1} parent=1 // pred_fallthru
      _
    // Predicated region
    $region38: #{tpu_custom_call.1} parent=1 // pred_check
      _
    $region39: #{tpu_custom_call.1} parent=1 // pred_check_branch
      %204 = sbr.rel (0) target = $region41
    $region40: #{tpu_custom_call.1} parent=1 // pred_region
      %206 = dma.done [#allocation4], 128
    $region41: #{tpu_custom_call.1} parent=1 // pred_fallthru
      _
    %207 = vsyncpa [#allocation3], 1
    %208 = vsyncpa [#allocation6], 1
    %209 = vsyncpa [#allocation4], 1

</llo_original>
